<compile_context>
chip_gen: v6e
topology: v6e:2x2x1
jax: 0.10.0
libtpu: 0.0.40
codegen_flags: <defaults>
</compile_context>

<pallas_src>
import math

import jax
import jax.numpy as jnp
from jax.experimental import pallas as pl
from jax.experimental.pallas import tpu as pltpu

_SUBLANES = 8                               # f32 sublane tile height
_AUTO_CHUNK_MIN_BYTES = 8 * 1024 * 1024     # below this, one DMA is plenty
_MAX_CHUNKS = 4                             # 2-4 outstanding DMAs hide latency


def _make_copy_kernel(chunks):
    """Build a kernel issuing one HBM->HBM DMA per (start, size) leading-dim chunk."""
    single = len(chunks) == 1

    def kernel(x_ref, o_ref, sems):
        copies = []
        for i, (start, size) in enumerate(chunks):
            if single:
                # Whole-array DMA: no slicing at all (most robust path).
                src, dst = x_ref, o_ref
            else:
                src = x_ref.at[pl.ds(start, size)]
                dst = o_ref.at[pl.ds(start, size)]
            cp = pltpu.make_async_copy(src, dst, sems.at[i])
            cp.start()
            copies.append(cp)
        # All copies are outstanding simultaneously; drain them in order.
        for cp in copies:
            cp.wait()

    return kernel


def _leading_dim_chunks(shape, itemsize, nchunks):
    """Static (start, size) chunks of the leading dim for the DMA copy."""
    d0 = shape[0]
    total_bytes = math.prod(shape) * itemsize
    if nchunks is None:
        nchunks = _MAX_CHUNKS if total_bytes >= _AUTO_CHUNK_MIN_BYTES else 1
    nchunks = max(1, min(nchunks, d0))

    if len(shape) < 2 or nchunks == 1:
        return ((0, d0),)

    if len(shape) == 2:
        # Leading dim is the sublane dim in HBM layout: keep chunk boundaries
        # aligned to a full sublane tile (8 rows x 32-bit packing) so every DMA
        # is whole-tile rectangular.  If d0 itself is not aligned, fall back to
        # a single whole-array DMA (still one read + one write pass).
        packing = max(1, 4 // itemsize)
        align = _SUBLANES * packing
        if d0 % align != 0:
            return ((0, d0),)
    else:
        # >=3-D: leading-dim slices are whole (padded) inner planes — any
        # boundary is fine.
        align = 1

    per = -(-d0 // nchunks)                  # ceil
    per = -(-per // align) * align           # round up to alignment
    chunks = []
    start = 0
    while start < d0:
        size = min(per, d0 - start)
        chunks.append((start, size))
        start += size
    return tuple(chunks)


def _pallas_identity_copy(x, nchunks=None):
    """Physical copy of `x` (order preserving) via direct HBM->HBM DMAs."""
    if x.ndim == 0 or x.size == 0:
        return x                              # nothing worth a DMA

    orig_dtype = x.dtype
    # bool is the one dtype we don't trust through a raw DMA; round-trip via u8.
    work = x.astype(jnp.uint8) if x.dtype == jnp.bool_ else x
    itemsize = jnp.dtype(work.dtype).itemsize
    chunks = _leading_dim_chunks(work.shape, itemsize, nchunks)
    nbytes = work.size * itemsize

    out = pl.pallas_call(
        _make_copy_kernel(chunks),
        out_shape=jax.ShapeDtypeStruct(work.shape, work.dtype),
        in_specs=[pl.BlockSpec(memory_space=pl.ANY)],    # raw HBM ref, no auto-DMA
        out_specs=pl.BlockSpec(memory_space=pl.ANY),
        scratch_shapes=[pltpu.SemaphoreType.DMA((len(chunks),))],
        cost_estimate=pl.CostEstimate(
            flops=0, transcendentals=0, bytes_accessed=2 * nbytes),
    )(work)

    if orig_dtype == jnp.bool_:
        out = out.astype(jnp.bool_)
    return out


class Reshape:
    """JAX/Pallas port of the PyTorch `Reshape` nn.Module.

    Default path is metadata-only (`jnp.reshape`), matching `Tensor.view` on a
    contiguous tensor — zero bytes moved.  Pass `copy=True` to force an
    independent physical copy of the element stream through the Pallas DMA
    kernel (the reshape of the copied buffer is again metadata-only).
    """

    def __init__(self, *args, copy=False):
        if len(args) == 1 and isinstance(args[0], (tuple, list)):
            args = tuple(args[0])
        self.shape = tuple(args)
        self.copy = copy

    def _resolve_shape(self, numel):
        shape = list(self.shape)
        neg = [i for i, s in enumerate(shape) if s == -1]
        if len(neg) > 1:
            raise ValueError("only one -1 allowed in view shape")
        if neg:
            known = 1
            for s in shape:
                if s != -1:
                    known *= s
            shape[neg[0]] = numel // known
        if math.prod(shape) != numel:
            raise ValueError(
                f"shape {tuple(shape)} is invalid for input of size {numel}")
        return tuple(shape)

    def __call__(self, x):
        numel = math.prod(x.shape)
        target = self._resolve_shape(numel)
        if not self.copy:
            # torch .view on a contiguous input == row-major reshape: metadata
            # only, no HBM traffic.
            return jnp.reshape(x, target)
        # Physical copy first (same shape, raw DMA), metadata reshape after.
        return jnp.reshape(_pallas_identity_copy(x), target)


if __name__ == "__main__":
    key = jax.random.PRNGKey(0)
    # Small NCHW-style input, consistent with how Reshape is used around convs.
    x = jax.random.normal(key, (2, 4, 16, 16), dtype=jnp.float32)

    # 1) Pallas copy path (explicit physical copy), e.g. Reshape(-1, C*H*W).
    y = jax.block_until_ready(Reshape(-1, 4 * 16 * 16, copy=True)(x))
    ref = jnp.reshape(x, (-1, 4 * 16 * 16))
    assert y.shape == ref.shape and y.dtype == ref.dtype
    assert bool(jnp.array_equal(y, ref))

    # 2) Default (recommended) metadata-only path back to NCHW.
    z = jax.block_until_ready(Reshape(2, 4, 16, 16)(y))
    assert z.shape == x.shape
    assert bool(jnp.array_equal(z, x))

    # 3) bf16 input: copied natively (no uint32 packing, no extra passes).
    xb = x.astype(jnp.bfloat16)
    yb = jax.block_until_ready(Reshape(2, -1, copy=True)(xb))
    assert yb.dtype == jnp.bfloat16
    assert bool(jnp.array_equal(yb, jnp.reshape(xb, (2, -1))))

    # 4) Multi-DMA chunked path: awkward leading dim on a 3-D tensor.
    w = jax.random.normal(jax.random.PRNGKey(1), (21, 8, 128), dtype=jnp.float32)
    wc = jax.block_until_ready(_pallas_identity_copy(w, nchunks=4))
    assert bool(jnp.array_equal(wc, w))

    # 5) Chunked 2-D bf16 copy with sublane-tile-aligned chunk boundaries.
    v = jax.random.normal(jax.random.PRNGKey(2), (64, 128),
                          dtype=jnp.float32).astype(jnp.bfloat16)
    vc = jax.block_until_ready(_pallas_identity_copy(v, nchunks=2))
    assert bool(jnp.array_equal(vc, v))

    print("KERNEL_OK")
</pallas_src>

<mosaic_0001>
module attributes {stable_mosaic.version = 11 : i64} {
  func.func @kernel(%arg0: memref<2x4x16x16xf32, #tpu.memory_space<any>>, %arg1: memref<2x4x16x16xf32, #tpu.memory_space<any>>, %arg2: memref<1x!tpu.dma_semaphore, #tpu.memory_space<semaphore_mem>>) attributes {dimension_semantics = [], scalar_prefetch = 0 : i64, scratch_operands = 1 : i64, tpu.core_type = #tpu.core_type<tc>} {
    %c0_i32 = arith.constant 0 : i32
    %0 = tpu.memref_slice %arg2[%c0_i32] : memref<1x!tpu.dma_semaphore, #tpu.memory_space<semaphore_mem>> -> memref<1x!tpu.dma_semaphore, #tpu.memory_space<semaphore_mem>>
    %1 = tpu.memref_squeeze %0 : memref<1x!tpu.dma_semaphore, #tpu.memory_space<semaphore_mem>> -> memref<!tpu.dma_semaphore, #tpu.memory_space<semaphore_mem>>
    tpu.enqueue_dma source(%arg0 : memref<2x4x16x16xf32, #tpu.memory_space<any>>) target(%arg1 : memref<2x4x16x16xf32, #tpu.memory_space<any>>) target_semaphore(%1 : memref<!tpu.dma_semaphore, #tpu.memory_space<semaphore_mem>>)
    %c0_i32_0 = arith.constant 0 : i32
    %2 = tpu.memref_slice %arg2[%c0_i32_0] : memref<1x!tpu.dma_semaphore, #tpu.memory_space<semaphore_mem>> -> memref<1x!tpu.dma_semaphore, #tpu.memory_space<semaphore_mem>>
    %3 = tpu.memref_squeeze %2 : memref<1x!tpu.dma_semaphore, #tpu.memory_space<semaphore_mem>> -> memref<!tpu.dma_semaphore, #tpu.memory_space<semaphore_mem>>
    tpu.wait_dma2 semaphore(%3 : memref<!tpu.dma_semaphore, #tpu.memory_space<semaphore_mem>>) src(%arg0 : memref<2x4x16x16xf32, #tpu.memory_space<any>>) dst(%arg1 : memref<2x4x16x16xf32, #tpu.memory_space<any>>)
    return
  }
}

</mosaic_0001>

<llo_original>
// kernel: tpu_custom_call.1
$region0: #{tpu_custom_call.1}
  #allocation0 [shape = 'u32[]', space=smem, size = 0x4, offset = 0x4, fixed_abs, tag = 'smem constant byte address 0x4 - core index']
  #allocation1 [shape = 'u32[144,128]{1,0:T(1,128)}', space=vmem, size = 0x12000, scoped, tag = 'internal scratch']
  #allocation2 [shape = 's32[1]{0}', space=sflag, size = 0x4, scoped, tag = 'scratch operand']
  #allocation3 [shape = 's32[]', space=sflag, size = 0x4, offset = 0, fixed_abs, tag = 'sflag constant byte address 0x0 - dummy sync flag']
  #allocation4 [shape = 'u32[0]{0}', space=smem, size = 0, offset = 0, fixed_abs, tag = 'smem constant byte address 0x0 - null']
  %s0 = inlined_call_operand.hbm [shape: f32[2,4,16,16], index: 0, kind: input, shape index: {}]
  %s1 = inlined_call_operand.hbm [shape: f32[2,4,16,16], index: 1, kind: output, shape index: {}]
  %s2 = sld [smem:[#allocation0]]
  $region2: #{tpu_custom_call.1} parent=0
    _
  %s4 = ssub.s32 1, %s2
  %s5 = scalar_select 0, %s4, %s2
  %s7 = sshll.u32 1, 14
  %s8 = sxor.u32 4294967295, %s7
  %12 = dma.general %s0, 2048, %s1, [#allocation2], 131072, [#allocation4], 0, 0
  %s13 = smul.u32 2, 4
  %s14 = smul.u32 %s13, 16
  %s15 = smul.u32 %s14, 1
  %s16 = sshll.u32 %s15, 4
  %17 = dma.done [#allocation2], %s16
  %18 = vsyncmov [#allocation2]
  %s19 = vpop.sfrf %18
  %p20 = scmp.eq.s32.totalorder %s19, 0
  %p21 = pneg %p20
  %23 = shalt.err (%p21)

</llo_original>
